<compile_context>
chip_gen: v5e
topology: v5e:2x2
jax: 0.10.0
libtpu: 0.0.40
codegen_flags: <defaults>
</compile_context>

<pallas_src>
import jax
import jax.numpy as jnp
import numpy as np
from jax.experimental import pallas as pl
from jax.experimental.pallas import tpu as pltpu

NEG_SLOPE = 0.2       # LeakyReLU negative slope from the module
BIAS_EPS = 1e-6       # bias_epsilon from the module
_DIST_FLOOR = 1e-30   # keeps packed KNN keys in the normal-f32 range (no FTZ issues)


def _pick_tile(n, max_tile=256):
    """Largest multiple-of-128 divisor of n that is <= max_tile, else n (full dim)."""
    t = (min(n, max_tile) // 128) * 128
    while t > 0:
        if n % t == 0:
            return t
        t -= 128
    return n


# ----------------------------- KNN kernel -----------------------------------
def _knn_kernel(pos_ref, posT_ref, idx_ref):
    # pos_ref : [1, N, 3]   all points (resident per batch)
    # posT_ref: [1, 3, TQ]  query tile, transposed (queries on lanes)
    # idx_ref : [1, K, TQ]  int32 output (lane-dense rows)
    N = pos_ref.shape[1]
    TQ = posT_ref.shape[2]
    K = idx_ref.shape[1]

    pts = pos_ref[0]                                                   # (N, 3)
    qT = posT_ref[0]                                                   # (3, TQ)

    # torch `square_distance`:  ||p||^2 + ||q||^2 - 2 p.q   (queries on lanes)
    p_sq = jnp.sum(pts * pts, axis=1, keepdims=True)                   # (N, 1)
    q_sq = jnp.sum(qT * qT, axis=0, keepdims=True)                     # (1, TQ)
    gram = jnp.dot(pts, qT, preferred_element_type=jnp.float32)        # (N, TQ)
    dist = p_sq + q_sq - 2.0 * gram                                    # (N, TQ)

    # Keyed-min selection: pack the point index into the low mantissa bits of
    # the (clamped, normal-range) squared distance so a SINGLE f32 min reduce
    # per neighbor yields both the minimum and its argmin.  Clearing the low
    # ceil(log2(N)) mantissa bits quantizes distances by ~2^-(23-bits) relative;
    # the selected set can differ from torch.topk only on near-exact ties
    # (ties are broken toward the smallest point index).
    idx_bits = max(1, (N - 1).bit_length())
    mask = (1 << idx_bits) - 1
    m_iota = jax.lax.broadcasted_iota(jnp.int32, (N, TQ), 0)
    dist = jnp.maximum(dist, _DIST_FLOOR)                              # >= 0, never denormal
    keys_i = (pltpu.bitcast(dist, jnp.int32) & jnp.int32(~mask)) | m_iota
    keys = pltpu.bitcast(keys_i, jnp.float32)                          # monotone in (dist, index)

    for j in range(K):
        kmin = jnp.min(keys, axis=0, keepdims=True)                    # (1, TQ)  single XLU reduce
        sel = pltpu.bitcast(kmin, jnp.int32) & jnp.int32(mask)         # (1, TQ)  point ids
        idx_ref[0, pl.ds(j, 1), :] = sel                               # lane-dense row store
        keys = jnp.where(keys == kmin, jnp.float32(jnp.inf), keys)     # drop the selected element


def knn_indices(pos, k):
    """pos: [B, N, 3] -> neighbor ids [B, k, N] int32 (N on the lane axis)."""
    B, N, _ = pos.shape
    posT = jnp.transpose(pos, (0, 2, 1))                               # [B, 3, N] (tiny)
    tq = _pick_tile(N)
    return pl.pallas_call(
        _knn_kernel,
        out_shape=jax.ShapeDtypeStruct((B, k, N), jnp.int32),
        grid=(B, N // tq),
        in_specs=[
            pl.BlockSpec((1, N, 3), lambda b, t: (b, 0, 0)),           # resident point slab
            pl.BlockSpec((1, 3, tq), lambda b, t: (b, 0, t)),          # query tile
        ],
        out_specs=pl.BlockSpec((1, k, tq), lambda b, t: (b, 0, t)),
        compiler_params=pltpu.CompilerParams(
            dimension_semantics=("parallel", "parallel")),
    )(pos, posT)


# --------------------- VN graph-attention main kernel ------------------------
def _vn_graph_attn_kernel(idx_ref, vfull_ref, q_ref,
                          w1a_ref, wq_ref, wd_ref, wp_ref, o_ref):
    # idx_ref  : [1, K, TN]  int32   neighbor ids (query tile on lanes)
    # vfull_ref: [1, 3, C, N]        full per-batch feature slab (gather source)
    # q_ref    : [1, 3, C, TN]       query tile (same array, tiled view)
    # w*_ref   : [C, C]              torch (out, in) layouts
    # o_ref    : [1, 3, C, TN]
    K = idx_ref.shape[1]
    TN = idx_ref.shape[2]
    C = vfull_ref.shape[2]
    N = vfull_ref.shape[3]

    w1a = w1a_ref[...]
    wq = wq_ref[...]
    wd = wd_ref[...]
    wp = wp_ref[...]

    def mm(a, b):
        # NOTE: default Mosaic f32 matmul precision is close to f32; set
        # precision=jax.lax.Precision.HIGHEST here for bit-closer torch parity.
        return jnp.dot(a, b, preferred_element_type=jnp.float32)

    # --- per-tile precompute (hoisted out of the K loop) ----------------------
    # VecLinear(2C->C) on cat([local_v - q, q]) is rewritten as
    #     y = W1a @ local_v + (W1b - W1a) @ q
    # so gathered neighbors only ever enter through A = W1a @ v, which is then
    # gathered with a one-hot MXU matmul (deep contraction over N) — no raw
    # gather and no HBM neighbor blowup.
    a_cat = jnp.concatenate([mm(w1a, vfull_ref[0, d]) for d in range(3)],
                            axis=0)                                     # (3C, N)
    qmix = [mm(wq, q_ref[0, d]) for d in range(3)]                      # 3 x (C, TN)

    idx_all = idx_ref[0]                                                # (K, TN)
    m_iota = jax.lax.broadcasted_iota(jnp.int32, (N, TN), 0)

    best_score = None
    best = None
    # Stream the K neighbor axis: the live set is a few (C, TN) slabs, which is
    # what keeps large TN tiles within VMEM on all generations.
    for kk in range(K):
        idx_row = idx_all[kk:kk + 1, :]                                 # (1, TN)
        onehot = (m_iota == idx_row).astype(jnp.float32)                # (N, TN)
        ylv = mm(a_cat, onehot)                                         # (3C, TN)
        y = [ylv[d * C:(d + 1) * C, :] + qmix[d] for d in range(3)]     # 3 x (C, TN)

        # VecActivation: VN LeakyReLU along the learned direction d = Wd @ y.
        # Single reciprocal + plane-scalar math (no per-plane divides / where).
        dv = [mm(wd, y[d]) for d in range(3)]
        dd = dv[0] * dv[0] + dv[1] * dv[1] + dv[2] * dv[2]
        # approx=True moves this to the EUP slot for extra speed at ~1e-4 rel error.
        inv = pl.reciprocal(jnp.sqrt(dd) + BIAS_EPS, approx=False)
        yd = y[0] * dv[0] + y[1] * dv[1] + y[2] * dv[2]
        coeff = (NEG_SLOPE - 1.0) * jnp.minimum(yd * inv, 0.0) * inv
        out = [y[d] + coeff * dv[d] for d in range(3)]

        # VecMaxPool over neighbors: per-channel argmax of <out, Wp @ out>,
        # kept as running accumulators (no (K,...) intermediates).
        pv = [mm(wp, out[d]) for d in range(3)]
        score = out[0] * pv[0] + out[1] * pv[1] + out[2] * pv[2]

        if kk == 0:
            best_score, best = score, out
        else:
            take = score > best_score          # strict: keep first max on ties (== argmax)
            best_score = jnp.where(take, score, best_score)
            best = [jnp.where(take, out[d], best[d]) for d in range(3)]

    for d in range(3):
        o_ref[0, d] = best[d].astype(o_ref.dtype)


def vn_dynamic_graph_attention(q, q_pos, W1, Wd, Wp, k):
    """q: [B,N,C,3], q_pos: [B,N,3]; W1: [C,2C], Wd/Wp: [C,C] (torch weight layouts).

    Returns (out [B,N,C,3], idx [B,N,k])."""
    B, N, C, _ = q.shape

    # 1) KNN indices, already in the lane-dense [B, k, N] layout the attention
    #    kernel consumes directly.
    idx_kn = knn_indices(q_pos, k)

    # 2) one layout-plumbing transpose of q only (no k-times gathered intermediate,
    #    no [B,N,k,C,3] HBM array, no relayout of it).
    q_r = jnp.transpose(q, (0, 3, 2, 1))                                # [B, 3, C, N]

    # VecLinear(2C->C) split: y = W1a @ local_v + (W1b - W1a) @ q
    w1a = W1[:, :C]
    wq = W1[:, C:] - W1[:, :C]

    tn = _pick_tile(N)
    out_r = pl.pallas_call(
        _vn_graph_attn_kernel,
        out_shape=jax.ShapeDtypeStruct((B, 3, C, N), q.dtype),
        grid=(B, N // tn),
        in_specs=[
            pl.BlockSpec((1, k, tn), lambda b, n: (b, 0, n)),           # neighbor ids
            pl.BlockSpec((1, 3, C, N), lambda b, n: (b, 0, 0, 0)),      # resident gather source
            pl.BlockSpec((1, 3, C, tn), lambda b, n: (b, 0, 0, n)),     # query tile
            pl.BlockSpec((C, C), lambda b, n: (0, 0)),                  # W1a
            pl.BlockSpec((C, C), lambda b, n: (0, 0)),                  # W1b - W1a
            pl.BlockSpec((C, C), lambda b, n: (0, 0)),                  # Wd
            pl.BlockSpec((C, C), lambda b, n: (0, 0)),                  # Wp
        ],
        out_specs=pl.BlockSpec((1, 3, C, tn), lambda b, n: (b, 0, 0, n)),
        compiler_params=pltpu.CompilerParams(
            dimension_semantics=("parallel", "parallel")),
    )(idx_kn, q_r, q_r, w1a, wq, Wd, Wp)

    out = jnp.transpose(out_r, (0, 3, 2, 1))                            # [B, N, C, 3]
    idx = jnp.transpose(idx_kn, (0, 2, 1))                              # [B, N, k] (torch layout)
    return out, idx


# ----------------------------- pure-JAX reference ----------------------------
def reference_forward(q, local_v, W1, Wd, Wp):
    HP = jax.lax.Precision.HIGHEST
    qe = jnp.broadcast_to(q[:, :, None], local_v.shape)                 # [B,N,K,C,3]
    feat = jnp.concatenate([local_v - qe, qe], axis=3)                  # [B,N,K,2C,3]
    y = jnp.einsum("oc,bnkcd->bnkod", W1, feat, precision=HP)
    d = jnp.einsum("oc,bnkcd->bnkod", Wd, y, precision=HP)
    dn = jnp.sqrt(jnp.sum(d * d, axis=-1, keepdims=True)) + BIAS_EPS
    ddir = d / dn
    dot = jnp.sum(y * ddir, axis=-1, keepdims=True)
    act = jnp.where(dot >= 0.0, dot, NEG_SLOPE * dot)
    out = y + (act - dot) * ddir                                        # [B,N,K,C,3]
    p = jnp.einsum("oc,bnkcd->bnkod", Wp, out, precision=HP)
    dotp = jnp.sum(out * p, axis=-1)                                    # [B,N,K,C]
    amax = jnp.argmax(dotp, axis=2)                                     # [B,N,C]
    pooled = jnp.take_along_axis(out, amax[:, :, None, :, None], axis=2)[:, :, 0]
    return pooled                                                       # [B,N,C,3]


if __name__ == "__main__":
    B, N, C, k = 2, 16, 8, 4   # dim=8, k=4 neighbors
    key = jax.random.PRNGKey(0)
    kq, kp, k1, k2, k3 = jax.random.split(key, 5)
    q = jax.random.normal(kq, (B, N, C, 3), jnp.float32)
    q_pos = jax.random.normal(kp, (B, N, 3), jnp.float32)
    # deterministic synthetic parameters (torch nn.Linear(bias=False) layouts)
    W1 = jax.random.normal(k1, (C, 2 * C), jnp.float32) / np.sqrt(2 * C)
    Wd = jax.random.normal(k2, (C, C), jnp.float32) / np.sqrt(C)
    Wp = jax.random.normal(k3, (C, C), jnp.float32) / np.sqrt(C)

    out, idx = vn_dynamic_graph_attention(q, q_pos, W1, Wd, Wp, k)
    out = jax.block_until_ready(out)
    assert out.shape == (B, N, C, 3)
    assert idx.shape == (B, N, k)

    # correctness check against a pure-JAX reference (re-using the kernel's KNN idx)
    local_v = q[jnp.arange(B)[:, None, None], idx]
    ref = reference_forward(q, local_v, W1, Wd, Wp)
    np.testing.assert_allclose(np.asarray(out), np.asarray(ref), rtol=2e-2, atol=2e-2)

    print("KERNEL_OK")
</pallas_src>

<mosaic_0001>
module attributes {stable_mosaic.version = 11 : i64} {
  func.func @_knn_kernel(%arg0: i32, %arg1: i32, %arg2: memref<1x16x3xf32, #tpu.memory_space<vmem>>, %arg3: memref<1x3x16xf32, #tpu.memory_space<vmem>>, %arg4: memref<1x4x16xi32, #tpu.memory_space<vmem>>) attributes {dimension_semantics = [#tpu.dimension_semantics<parallel>, #tpu.dimension_semantics<parallel>], iteration_bounds = array<i64: 2, 1>, scalar_prefetch = 0 : i64, scratch_operands = 0 : i64, tpu.core_type = #tpu.core_type<tc>, window_params = [{transform_indices = @transform_0, window_bounds = array<i64: 1, 16, 3>}, {transform_indices = @transform_1, window_bounds = array<i64: 1, 3, 16>}, {transform_indices = @transform_2, window_bounds = array<i64: 1, 4, 16>}]} {
    %c0 = arith.constant 0 : index
    %c0_0 = arith.constant 0 : index
    %c0_1 = arith.constant 0 : index
    %0 = vector.load %arg2[%c0, %c0_0, %c0_1] : memref<1x16x3xf32, #tpu.memory_space<vmem>>, vector<1x16x3xf32>
    %1 = vector.shape_cast %0 : vector<1x16x3xf32> to vector<16x3xf32>
    %c0_2 = arith.constant 0 : index
    %c0_3 = arith.constant 0 : index
    %c0_4 = arith.constant 0 : index
    %2 = vector.load %arg3[%c0_2, %c0_3, %c0_4] : memref<1x3x16xf32, #tpu.memory_space<vmem>>, vector<1x3x16xf32>
    %3 = vector.shape_cast %2 : vector<1x3x16xf32> to vector<3x16xf32>
    %4 = arith.mulf %1, %1 : vector<16x3xf32>
    %cst = arith.constant dense<0.000000e+00> : vector<16xf32>
    %5 = vector.multi_reduction <add>, %4, %cst [1] : vector<16x3xf32> to vector<16xf32>
    %6 = vector.shape_cast %5 : vector<16xf32> to vector<16x1xf32>
    %7 = arith.mulf %3, %3 : vector<3x16xf32>
    %cst_5 = arith.constant dense<0.000000e+00> : vector<16xf32>
    %8 = vector.multi_reduction <add>, %7, %cst_5 [0] : vector<3x16xf32> to vector<16xf32>
    %9 = vector.shape_cast %8 : vector<16xf32> to vector<1x16xf32>
    %cst_6 = arith.constant dense<0.000000e+00> : vector<16x16xf32>
    %10 = tpu.matmul %1, %3, %cst_6 {dimension_numbers = #tpu.dot_dimension_numbers<[1], [0], [0], [1], [0, 0, 1, 1], [], []>} : vector<16x3xf32>, vector<3x16xf32>, vector<16x16xf32> -> vector<16x16xf32>
    %11 = vector.broadcast %6 : vector<16x1xf32> to vector<16x16xf32>
    %12 = vector.broadcast %9 : vector<1x16xf32> to vector<16x16xf32>
    %13 = arith.addf %11, %12 : vector<16x16xf32>
    %cst_7 = arith.constant 2.000000e+00 : f32
    %14 = vector.broadcast %cst_7 : f32 to vector<16x16xf32>
    %15 = arith.mulf %14, %10 : vector<16x16xf32>
    %16 = arith.subf %13, %15 : vector<16x16xf32>
    %17 = tpu.iota {dimensions = array<i32: 0>} : vector<16x16xi32>
    %cst_8 = arith.constant 1.000000e-30 : f32
    %18 = vector.broadcast %cst_8 : f32 to vector<16x16xf32>
    %19 = arith.maximumf %16, %18 : vector<16x16xf32>
    %20 = tpu.bitcast %19 : vector<16x16xf32> -> vector<16x16xi32>
    %c-16_i32 = arith.constant -16 : i32
    %21 = vector.broadcast %c-16_i32 : i32 to vector<16x16xi32>
    %22 = arith.andi %20, %21 : vector<16x16xi32>
    %23 = arith.ori %22, %17 : vector<16x16xi32>
    %24 = tpu.bitcast %23 : vector<16x16xi32> -> vector<16x16xf32>
    %cst_9 = arith.constant dense<0x7F800000> : vector<16xf32>
    %25 = vector.multi_reduction <minimumf>, %24, %cst_9 [0] : vector<16x16xf32> to vector<16xf32>
    %26 = vector.shape_cast %25 : vector<16xf32> to vector<1x16xf32>
    %27 = tpu.bitcast %26 : vector<1x16xf32> -> vector<1x16xi32>
    %c15_i32 = arith.constant 15 : i32
    %28 = vector.broadcast %c15_i32 : i32 to vector<1x16xi32>
    %29 = arith.andi %27, %28 : vector<1x16xi32>
    %c0_10 = arith.constant 0 : index
    %c0_11 = arith.constant 0 : index
    %c0_12 = arith.constant 0 : index
    %30 = vector.load %arg4[%c0_10, %c0_11, %c0_12] : memref<1x4x16xi32, #tpu.memory_space<vmem>>, vector<1x1x16xi32>
    %31 = vector.shape_cast %30 : vector<1x1x16xi32> to vector<1x16xi32>
    %32 = vector.shape_cast %29 : vector<1x16xi32> to vector<1x1x16xi32>
    tpu.vector_store %arg4[%c0_10, %c0_11, %c0_12], %32 {strides = array<i32>} : memref<1x4x16xi32, #tpu.memory_space<vmem>>, vector<1x1x16xi32>,
    %33 = vector.broadcast %26 : vector<1x16xf32> to vector<16x16xf32>
    %34 = arith.cmpf oeq, %24, %33 : vector<16x16xf32>
    %cst_13 = arith.constant 0x7F800000 : f32
    %35 = vector.broadcast %cst_13 : f32 to vector<16x16xf32>
    %36 = arith.select %34, %35, %24 : vector<16x16xi1>, vector<16x16xf32>
    %cst_14 = arith.constant dense<0x7F800000> : vector<16xf32>
    %37 = vector.multi_reduction <minimumf>, %36, %cst_14 [0] : vector<16x16xf32> to vector<16xf32>
    %38 = vector.shape_cast %37 : vector<16xf32> to vector<1x16xf32>
    %39 = tpu.bitcast %38 : vector<1x16xf32> -> vector<1x16xi32>
    %c15_i32_15 = arith.constant 15 : i32
    %40 = vector.broadcast %c15_i32_15 : i32 to vector<1x16xi32>
    %41 = arith.andi %39, %40 : vector<1x16xi32>
    %c0_16 = arith.constant 0 : index
    %c1 = arith.constant 1 : index
    %c0_17 = arith.constant 0 : index
    %42 = vector.load %arg4[%c0_16, %c1, %c0_17] : memref<1x4x16xi32, #tpu.memory_space<vmem>>, vector<1x1x16xi32>
    %43 = vector.shape_cast %42 : vector<1x1x16xi32> to vector<1x16xi32>
    %44 = vector.shape_cast %41 : vector<1x16xi32> to vector<1x1x16xi32>
    tpu.vector_store %arg4[%c0_16, %c1, %c0_17], %44 {strides = array<i32>} : memref<1x4x16xi32, #tpu.memory_space<vmem>>, vector<1x1x16xi32>,
    %45 = vector.broadcast %38 : vector<1x16xf32> to vector<16x16xf32>
    %46 = arith.cmpf oeq, %36, %45 : vector<16x16xf32>
    %cst_18 = arith.constant 0x7F800000 : f32
    %47 = vector.broadcast %cst_18 : f32 to vector<16x16xf32>
    %48 = arith.select %46, %47, %36 : vector<16x16xi1>, vector<16x16xf32>
    %cst_19 = arith.constant dense<0x7F800000> : vector<16xf32>
    %49 = vector.multi_reduction <minimumf>, %48, %cst_19 [0] : vector<16x16xf32> to vector<16xf32>
    %50 = vector.shape_cast %49 : vector<16xf32> to vector<1x16xf32>
    %51 = tpu.bitcast %50 : vector<1x16xf32> -> vector<1x16xi32>
    %c15_i32_20 = arith.constant 15 : i32
    %52 = vector.broadcast %c15_i32_20 : i32 to vector<1x16xi32>
    %53 = arith.andi %51, %52 : vector<1x16xi32>
    %c0_21 = arith.constant 0 : index
    %c2 = arith.constant 2 : index
    %c0_22 = arith.constant 0 : index
    %54 = vector.load %arg4[%c0_21, %c2, %c0_22] : memref<1x4x16xi32, #tpu.memory_space<vmem>>, vector<1x1x16xi32>
    %55 = vector.shape_cast %54 : vector<1x1x16xi32> to vector<1x16xi32>
    %56 = vector.shape_cast %53 : vector<1x16xi32> to vector<1x1x16xi32>
    tpu.vector_store %arg4[%c0_21, %c2, %c0_22], %56 {strides = array<i32>} : memref<1x4x16xi32, #tpu.memory_space<vmem>>, vector<1x1x16xi32>,
    %57 = vector.broadcast %50 : vector<1x16xf32> to vector<16x16xf32>
    %58 = arith.cmpf oeq, %48, %57 : vector<16x16xf32>
    %cst_23 = arith.constant 0x7F800000 : f32
    %59 = vector.broadcast %cst_23 : f32 to vector<16x16xf32>
    %60 = arith.select %58, %59, %48 : vector<16x16xi1>, vector<16x16xf32>
    %cst_24 = arith.constant dense<0x7F800000> : vector<16xf32>
    %61 = vector.multi_reduction <minimumf>, %60, %cst_24 [0] : vector<16x16xf32> to vector<16xf32>
    %62 = vector.shape_cast %61 : vector<16xf32> to vector<1x16xf32>
    %63 = tpu.bitcast %62 : vector<1x16xf32> -> vector<1x16xi32>
    %c15_i32_25 = arith.constant 15 : i32
    %64 = vector.broadcast %c15_i32_25 : i32 to vector<1x16xi32>
    %65 = arith.andi %63, %64 : vector<1x16xi32>
    %c0_26 = arith.constant 0 : index
    %c3 = arith.constant 3 : index
    %c0_27 = arith.constant 0 : index
    %66 = vector.load %arg4[%c0_26, %c3, %c0_27] : memref<1x4x16xi32, #tpu.memory_space<vmem>>, vector<1x1x16xi32>
    %67 = vector.shape_cast %66 : vector<1x1x16xi32> to vector<1x16xi32>
    %68 = vector.shape_cast %65 : vector<1x16xi32> to vector<1x1x16xi32>
    tpu.vector_store %arg4[%c0_26, %c3, %c0_27], %68 {strides = array<i32>} : memref<1x4x16xi32, #tpu.memory_space<vmem>>, vector<1x1x16xi32>,
    return
  }
  func.func @transform_0(%arg0: i32, %arg1: i32) -> (i32, i32, i32) {
    %c0_i32 = arith.constant 0 : i32
    %c0_i32_0 = arith.constant 0 : i32
    %c0_i32_1 = arith.constant 0 : i32
    return %arg0, %c0_i32, %c0_i32_0 : i32, i32, i32
  }
  func.func @transform_1(%arg0: i32, %arg1: i32) -> (i32, i32, i32) {
    %c0_i32 = arith.constant 0 : i32
    %c0_i32_0 = arith.constant 0 : i32
    return %arg0, %c0_i32, %arg1 : i32, i32, i32
  }
  func.func @transform_2(%arg0: i32, %arg1: i32) -> (i32, i32, i32) {
    %c0_i32 = arith.constant 0 : i32
    %c0_i32_0 = arith.constant 0 : i32
    return %arg0, %c0_i32, %arg1 : i32, i32, i32
  }
}

</mosaic_0001>

<llo_original>
// kernel: tpu_custom_call.1
$region0: #{tpu_custom_call.1}
  #allocation0 [shape = 'u32[]', space=smem, size = 0x4, offset = 0x4, fixed_abs, tag = 'smem constant byte address 0x4 - core index']
  #allocation1 [shape = 'u32[72,128]{1,0:T(1,128)}', space=vmem, size = 0x9000, scoped, tag = 'internal scratch']
  %s0 = inlined_call_operand.vmem [shape: f32[2,16,3], index: 0, kind: input, shape index: {}]
  %s1 = inlined_call_operand.vmem [shape: f32[2,3,16], index: 1, kind: input, shape index: {}]
  %s2 = inlined_call_operand.hbm [shape: s32[2,4,16], index: 2, kind: output, shape index: {}]
  %s3 = sld [smem:[#allocation0]]
  $region41: #{tpu_custom_call.1} parent=0
    _
  %s5 = ssub.s32 1, %s3
  %s6 = scalar_select 0, %s5, %s3
  $region1: #{tpu_custom_call.1} parent=0
    #allocation2 [shape = 'u8[4096]{0}', space=vmem, size = 0x1000, scoped, tag = 'output window, operand 0']
    #allocation3 [shape = 's32[2]{0}', space=sflag, size = 0x8, scoped, tag = 'scoped memory for tpu_custom_call.1']
    %7 = vsyncpa [#allocation3], 0
    %s8 = scalar_lea.sflag [#allocation3], 1
    %9 = vsyncpa %s8, 0
    loop: start=0, step=1, limit=4
    $region2: #{tpu_custom_call.1} parent=1 // loop_pre_header
      _
    $region3: #{tpu_custom_call.1} parent=1 // loop_header
      %s11 = sphi 0, %s15
      %p12 = scmp.ge.s32.totalorder %s11, 4
      %s18 = sphi 0, %s30
      %s19 = sphi 0, %s26
      %s20 = sphi 0, %s18
      %s21 = sphi 0, %s19
      %s22 = sphi 0, %s20
      %s23 = sphi 0, %s21
      %s33 = sphi 0, %s35
      %s36 = sphi 0, %s33
      %s37 = sphi 0, %s36
      %s53 = sphi 0, %s37
      %s61 = sphi 0, %s63
      %s64 = sphi 0, %s61
      %s65 = sphi 0, %s64
      %s81 = sphi 0, %s65
      %s89 = sphi 0, %s91
      %s92 = sphi 0, %s89
      %s93 = sphi 0, %s92
      %s109 = sphi 0, %s93
    $region4: #{tpu_custom_call.1} parent=1 // loop_header_branch
      %14 = sbr.rel (%p12) target = $region8
    $region5: #{tpu_custom_call.1} parent=1 // loop_body
      %s16 = ssub.s32 %s11, 1
      %s17 = ssub.s32 %s11, 2
      %s24 = sadd.s32 1, %s19
      %p25 = scmp.ge.s32.totalorder %s24, 1
      %s26 = scalar_select %p25, 0, %s24
      %s27 = sadd.s32 1, %s18
      %s28 = scalar_select %p25, %s27, %s18
      %p29 = scmp.ge.s32.totalorder %s28, 2
      %s30 = scalar_select %p29, 0, %s28
      %s31 = ssub.s32 %s18, %s30
      %p32 = scmp.eq.s32.totalorder %s31, 0
      %s34 = sadd.s32 %s33, 1
      %s35 = scalar_select %p32, %s33, %s34
      %p38 = pneg %p32
      %p39 = scmp.eq.s32.totalorder %s11, 1
      %p40 = por %p38, %p39
      %p41 = scmp.ne.s32.totalorder %s33, %s36
      %p42 = scmp.eq.s32.totalorder %s11, 0
      %p43 = por %p41, %p42
      %p44 = scmp.ne.s32.totalorder %s33, %s36
      %p45 = scmp.eq.s32.totalorder %s16, 1
      %p46 = por %p44, %p45
      %p47 = scmp.ne.s32.totalorder %s36, %s37
      %p48 = scmp.eq.s32.totalorder %s16, 0
      %p49 = por %p47, %p48
      %p50 = scmp.ne.s32.totalorder %s36, %s37
      %p51 = scmp.eq.s32.totalorder %s17, 1
      %p52 = por %p50, %p51
      %p54 = scmp.ne.s32.totalorder %s37, %s53
      %p55 = scmp.eq.s32.totalorder %s17, 0
      %p56 = por %p54, %p55
      %s57 = ssub.s32 %s18, %s30
      %s58 = ssub.s32 %s19, %s26
      %s59 = sor.u32 %s57, %s58
      %p60 = scmp.eq.s32.totalorder %s59, 0
      %s62 = sadd.s32 %s61, 1
      %s63 = scalar_select %p60, %s61, %s62
      %p66 = pneg %p60
      %p67 = scmp.eq.s32.totalorder %s11, 1
      %p68 = por %p66, %p67
      %p69 = scmp.ne.s32.totalorder %s61, %s64
      %p70 = scmp.eq.s32.totalorder %s11, 0
      %p71 = por %p69, %p70
      %p72 = scmp.ne.s32.totalorder %s61, %s64
      %p73 = scmp.eq.s32.totalorder %s16, 1
      %p74 = por %p72, %p73
      %p75 = scmp.ne.s32.totalorder %s64, %s65
      %p76 = scmp.eq.s32.totalorder %s16, 0
      %p77 = por %p75, %p76
      %p78 = scmp.ne.s32.totalorder %s64, %s65
      %p79 = scmp.eq.s32.totalorder %s17, 1
      %p80 = por %p78, %p79
      %p82 = scmp.ne.s32.totalorder %s65, %s81
      %p83 = scmp.eq.s32.totalorder %s17, 0
      %p84 = por %p82, %p83
      %s85 = ssub.s32 %s18, %s30
      %s86 = ssub.s32 %s19, %s26
      %s87 = sor.u32 %s85, %s86
      %p88 = scmp.eq.s32.totalorder %s87, 0
      %s90 = sadd.s32 %s89, 1
      %s91 = scalar_select %p88, %s89, %s90
      %p94 = pneg %p88
      %p95 = scmp.eq.s32.totalorder %s11, 1
      %p96 = por %p94, %p95
      %p97 = scmp.ne.s32.totalorder %s89, %s92
      %p98 = scmp.eq.s32.totalorder %s11, 0
      %p99 = por %p97, %p98
      %p100 = scmp.ne.s32.totalorder %s89, %s92
      %p101 = scmp.eq.s32.totalorder %s16, 1
      %p102 = por %p100, %p101
      %p103 = scmp.ne.s32.totalorder %s92, %s93
      %p104 = scmp.eq.s32.totalorder %s16, 0
      %p105 = por %p103, %p104
      %p106 = scmp.ne.s32.totalorder %s92, %s93
      %p107 = scmp.eq.s32.totalorder %s17, 1
      %p108 = por %p106, %p107
      %p110 = scmp.ne.s32.totalorder %s93, %s109
      %p111 = scmp.eq.s32.totalorder %s17, 0
      %p112 = por %p110, %p111
      %p113 = scmp.le.s32.totalorder 1, %s11
      %p114 = scmp.lt.s32.totalorder %s11, 3
      %p115 = pnand %p113, %p114
      %p116 = pneg %p115
      // Predicated region
      $region9: #{tpu_custom_call.1} parent=5 // pred_check
        _
      $region10: #{tpu_custom_call.1} parent=5 // pred_check_branch
        %118 = sbr.rel (%p115) target = $region12
      $region11: #{tpu_custom_call.1} parent=5 // pred_region
        %s119 = ssub.s32 %s11, 1
      $region12: #{tpu_custom_call.1} parent=5 // pred_fallthru
        _
      %p120 = scmp.lt.s32.totalorder %s11, 2
      // Predicated region
      $region13: #{tpu_custom_call.1} parent=5 // pred_check
        %p121 = pneg %p120
      $region14: #{tpu_custom_call.1} parent=5 // pred_check_branch
        %123 = sbr.rel (%p121) target = $region16
      $region15: #{tpu_custom_call.1} parent=5 // pred_region
        // Predicated region
        $region17: #{tpu_custom_call.1} parent=15 // pred_check
          %p124 = pneg %p43
        $region18: #{tpu_custom_call.1} parent=15 // pred_check_branch
          %126 = sbr.rel (%p124) target = $region20
        $region19: #{tpu_custom_call.1} parent=15 // pred_region
          %p127 = scmp.lt.s32.totalorder %s18, 1
          %s128 = scalar_select %p127, %s18, 1
          %s129 = smul.addr %s128, 2
          %s130 = smul.addr %s129, 8
          %s131 = scalar_lea.vmem %s0, %s130
        $region20: #{tpu_custom_call.1} parent=15 // pred_fallthru
          _
        // Predicated region
        $region21: #{tpu_custom_call.1} parent=15 // pred_check
          %p132 = pneg %p71
        $region22: #{tpu_custom_call.1} parent=15 // pred_check_branch
          %134 = sbr.rel (%p132) target = $region24
        $region23: #{tpu_custom_call.1} parent=15 // pred_region
          %p135 = scmp.lt.s32.totalorder %s18, 1
          %s136 = scalar_select %p135, %s18, 1
          %p137 = scmp.lt.s32.totalorder %s19, 0
          %s138 = scalar_select %p137, %s19, 0
          %s139 = sadd.s32 %s138, %s136
          %s140 = smul.addr %s139, 4
          %s141 = scalar_lea.vmem %s1, %s140
        $region24: #{tpu_custom_call.1} parent=15 // pred_fallthru
          _
      $region16: #{tpu_custom_call.1} parent=5 // pred_fallthru
        _
      %p142 = scmp.le.s32.totalorder 1, %s11
      %p143 = scmp.lt.s32.totalorder %s11, 3
      %p144 = pnand %p142, %p143
      %p145 = pneg %p144
      // Predicated region
      $region25: #{tpu_custom_call.1} parent=5 // pred_check
        _
      $region26: #{tpu_custom_call.1} parent=5 // pred_check_branch
        %147 = sbr.rel (%p144) target = $region28
      $region27: #{tpu_custom_call.1} parent=5 // pred_region
        %s148 = ssub.s32 %s11, 1
        %p149 = scmp.lt.s32.totalorder %s20, 1
        %s150 = scalar_select %p149, %s20, 1
        %s151 = smul.addr %s150, 2
        %s152 = smul.addr %s151, 8
        %s153 = scalar_lea.vmem %s0, %s152
        %p154 = pneg %p49
        %p155 = pneg %p46
        %p156 = scmp.lt.s32.totalorder %s20, 1
        %s157 = scalar_select %p156, %s20, 1
        %p158 = scmp.lt.s32.totalorder %s21, 0
        %s159 = scalar_select %p158, %s21, 0
        %s160 = sadd.s32 %s159, %s157
        %s161 = smul.addr %s160, 4
        %s162 = scalar_lea.vmem %s1, %s161
        %p163 = pneg %p77
        %p164 = pneg %p74
        %p165 = pneg %p105
        %p166 = pneg %p102
        %s167 = sand.u32 %s92, 1
        %s168 = scalar_lea.sflag [#allocation3], %s167
        %s169 = sand.u32 %s92, 1
        %s170 = smul.addr %s169, 4
        %s171 = scalar_lea.vmem [#allocation2], %s170
        %p172 = scmp.lt.s32.totalorder %s20, 1
        %s173 = scalar_select %p172, %s20, 1
        %s174 = smul.addr %s173, 2
        %s175 = smul.addr %s174, 8
        %s176 = scalar_lea.vmem %s0, %s175
        %p177 = scmp.lt.s32.totalorder %s20, 1
        %s178 = scalar_select %p177, %s20, 1
        %p179 = scmp.lt.s32.totalorder %s21, 0
        %s180 = scalar_select %p179, %s21, 0
        %s181 = sadd.s32 %s180, %s178
        %s182 = smul.addr %s181, 4
        %s183 = scalar_lea.vmem %s1, %s182
        %v184 = vld [vmem:[%s176] sm:$0xff]
        %v185 = vld [vmem:[%s176 + $0x8] sm:$0xff]
        %v186 = vld [vmem:[%s183] sm:$0x7]
        %v187 = vmul.f32 %v184, %v184
        %v188 = vmul.f32 %v185, %v185
        %vm189 = vcmask 23552
        %v190 = vsel %vm189, %v187, 0.0
        %191 = vadd.xlane.f32.xlu0 %v190
        %v192 = vpop.xlane.xlu0 %191
        %v193 = vsel %vm189, %v188, 0.0
        %194 = vadd.xlane.f32.xlu0 %v193
        %v195 = vpop.xlane.xlu0 %194
        %v196 = vmul.f32 %v186, %v186
        %vm197 = vcmask 124928
        %v198 = vsel %vm197, %v196, 0.0
        %v199 = vrot.slane %v198, 4
        %v200 = vadd.f32 %v198, %v199
        %v201 = vrot.slane %v200, 2
        %v202 = vadd.f32 %v200, %v201
        %v203 = vrot.slane %v202, 1
        %v204 = vadd.f32 %v202, %v203
        %v206 = vsel %vm189, %v184, 0
        %v209 = vsel %vm189, %v185, 0
        %vm211 = vcmask 1042432
        %v213 = vsel %vm211, %v186, 0
        %215 = vmatpush.msra.mxu0 0.0
        %216 = vmatpush.msra.mxu0 0.0
        %217 = vmatpush.msra.mxu0 0.0
        %218 = vmatpush.msra.mxu0 0.0
        %219 = vmatpush.msra.mxu0 0.0
        %220 = vmatpush.msra.mxu0 0.0
        %221 = vmatpush.msra.mxu0 0.0
        %222 = vmatpush.msra.mxu0 0.0
        %223 = vmatpush.msra.mxu0 0.0
        %224 = vmatpush.msra.mxu0 0.0
        %225 = vmatpush.msra.mxu0 0.0
        %226 = vmatpush.msra.mxu0 0.0
        %227 = vmatpush.msra.mxu0 0.0
        %228 = vmatpush.msra.mxu0 0.0
        %229 = vmatpush.msra.mxu0 0.0
        %230 = vmatpush.msra.mxu0 %v213
        %231 = vmatmul.f32.gmra.mxu0 %v206
        %v232 = vpop.f32.mrf.mxu0
        %v233 = vadd.f32 0.0, %v232
        %234 = vmatmul.f32.gmra.mxu0 %v209
        %v235 = vpop.f32.mrf.mxu0
        %v236 = vadd.f32 0.0, %v235
        %237 = vdwg.mxu0
        %v238 = vadd.f32 %v192, %v204
        %v239 = vadd.f32 %v195, %v204
        %v240 = vmul.f32 %v233, 2.0
        %v241 = vmul.f32 %v236, 2.0
        %v242 = vsub.f32 %v238, %v240
        %v243 = vsub.f32 %v239, %v241
        %v244 = vlaneseq
        %v245 = vshrl.u32 %v244, 7
        %v246 = vadd.s32 %v245, 8
        %v247 = vmax.f32 %v242, 1e-30
        %v248 = vmax.f32 %v243, 1e-30
        %v251 = vand.u32 %v247, 4294967280
        %v252 = vand.u32 %v248, 4294967280
        %v253 = vor.u32 %v251, %v245
        %v254 = vor.u32 %v252, %v246
        %vm257 = vcmask 130048
        %v258 = vsel %vm257, %v253, inf
        %v259 = vsel %vm257, %v254, inf
        %v260 = vmin.f32 %v258, %v259
        %v261 = vrot.slane %v260, 4
        %v262 = vmin.f32 %v260, %v261
        %v263 = vrot.slane %v262, 2
        %v264 = vmin.f32 %v262, %v263
        %v265 = vrot.slane %v264, 1
        %v266 = vmin.f32 %v264, %v265
        %v268 = vand.u32 %v266, 15
        %vm269 = vcmask 122880
        %270 = vst.msk [vmem:[%s171] sm:$0x1] %vm269, %v268
        %vm271 = vcmp.eq.f32.partialorder %v253, %v266
        %vm272 = vcmp.eq.f32.partialorder %v254, %v266
        %v273 = vsel %vm271, inf, %v253
        %v274 = vsel %vm272, inf, %v254
        %v275 = vsel %vm257, %v273, inf
        %v276 = vsel %vm257, %v274, inf
        %v277 = vmin.f32 %v275, %v276
        %v278 = vrot.slane %v277, 4
        %v279 = vmin.f32 %v277, %v278
        %v280 = vrot.slane %v279, 2
        %v281 = vmin.f32 %v279, %v280
        %v282 = vrot.slane %v281, 1
        %v283 = vmin.f32 %v281, %v282
        %v285 = vand.u32 %v283, 15
        %286 = vst.msk [vmem:[%s171 + $0x1] sm:$0x1] %vm269, %v285
        %vm287 = vcmp.eq.f32.partialorder %v273, %v283
        %vm288 = vcmp.eq.f32.partialorder %v274, %v283
        %v289 = vsel %vm287, inf, %v273
        %v290 = vsel %vm288, inf, %v274
        %v291 = vsel %vm257, %v289, inf
        %v292 = vsel %vm257, %v290, inf
        %v293 = vmin.f32 %v291, %v292
        %v294 = vrot.slane %v293, 4
        %v295 = vmin.f32 %v293, %v294
        %v296 = vrot.slane %v295, 2
        %v297 = vmin.f32 %v295, %v296
        %v298 = vrot.slane %v297, 1
        %v299 = vmin.f32 %v297, %v298
        %v301 = vand.u32 %v299, 15
        %302 = vst.msk [vmem:[%s171 + $0x2] sm:$0x1] %vm269, %v301
        %vm303 = vcmp.eq.f32.partialorder %v289, %v299
        %vm304 = vcmp.eq.f32.partialorder %v290, %v299
        %v305 = vsel %vm303, inf, %v289
        %v306 = vsel %vm304, inf, %v290
        %v307 = vsel %vm257, %v305, inf
        %v308 = vsel %vm257, %v306, inf
        %v309 = vmin.f32 %v307, %v308
        %v310 = vrot.slane %v309, 4
        %v311 = vmin.f32 %v309, %v310
        %v312 = vrot.slane %v311, 2
        %v313 = vmin.f32 %v311, %v312
        %v314 = vrot.slane %v313, 1
        %v315 = vmin.f32 %v313, %v314
        %v317 = vand.u32 %v315, 15
        %318 = vst.msk [vmem:[%s171 + $0x3] sm:$0x1] %vm269, %v317
        %s319 = sand.u32 %s92, 1
        %s320 = scalar_lea.sflag [#allocation3], %s319
        %s321 = sand.u32 %s92, 1
        %s322 = smul.addr %s321, 4
        %s323 = scalar_lea.vmem [#allocation2], %s322
        // Predicated region
        $region29: #{tpu_custom_call.1} parent=27 // pred_check
          %p324 = pneg %p102
        $region30: #{tpu_custom_call.1} parent=27 // pred_check_branch
          %326 = sbr.rel (%p324) target = $region32
        $region31: #{tpu_custom_call.1} parent=27 // pred_region
          %328 = vsyncadd %s320, 0
          %s329 = sadd.s32 %s21, %s20
          %s330 = smul.addr %s329, 4
          %s331 = scalar_lea.hbm %s2, %s330
          %s333 = sshll.u32 %s323, 4
          %s334 = int_to_ptr.vmem [resolvable:$true] %s333
          %s335 = sshll.u32 %s331, 4
          %s336 = int_to_ptr.hbm [resolvable:$true] %s335
          %338 = dma.vmem_to_hbm [thread:$0]  %s334, 64, %s336, %s320
        $region32: #{tpu_custom_call.1} parent=27 // pred_fallthru
          _
      $region28: #{tpu_custom_call.1} parent=5 // pred_fallthru
        _
      %p339 = scmp.le.s32.totalorder 2, %s11
      // Predicated region
      $region33: #{tpu_custom_call.1} parent=5 // pred_check
        %p340 = pneg %p339
      $region34: #{tpu_custom_call.1} parent=5 // pred_check_branch
        %342 = sbr.rel (%p340) target = $region36
      $region35: #{tpu_custom_call.1} parent=5 // pred_region
        %s343 = ssub.s32 %s11, 2
        // Predicated region
        $region37: #{tpu_custom_call.1} parent=35 // pred_check
          %p344 = pneg %p108
        $region38: #{tpu_custom_call.1} parent=35 // pred_check_branch
          %346 = sbr.rel (%p344) target = $region40
        $region39: #{tpu_custom_call.1} parent=35 // pred_region
          %s347 = sand.u32 %s93, 1
          %s348 = scalar_lea.sflag [#allocation3], %s347
          %s349 = sand.u32 %s93, 1
          %s350 = smul.addr %s349, 4
          %s351 = scalar_lea.vmem [#allocation2], %s350
          %353 = dma.done %s348, 64
        $region40: #{tpu_custom_call.1} parent=35 // pred_fallthru
          _
      $region36: #{tpu_custom_call.1} parent=5 // pred_fallthru
        _
    $region6: #{tpu_custom_call.1} parent=1 // loop_footer
      %s15 = sadd.s32 1, %s11
    $region7: #{tpu_custom_call.1} parent=1 // loop_footer_branch
      %10 = sbr.rel target = $region3
    $region8: #{tpu_custom_call.1} parent=1 // loop_exit
      _
    %354 = vsyncpa [#allocation3], 1
    %s355 = scalar_lea.sflag [#allocation3], 1
    %356 = vsyncpa %s355, 1

</llo_original>
